<compile_context>
chip_gen: v7x
topology: tpu7x:2x2x1
jax: 0.10.0
libtpu: 0.0.40
codegen_flags: <defaults>
</compile_context>

<pallas_src>
import functools
import math

import jax
import jax.numpy as jnp
from jax import lax
from jax.experimental import pallas as pl
from jax.experimental.pallas import tpu as pltpu


_TARGET_TILE_BYTES = 2 * 1024 * 1024     # ~2 MiB input tiles per grid step
_PLANE_BYTES_CAP = 256 * 1024            # full-plane fold only below this size
_VMEM_LIMIT_BYTES = 32 * 1024 * 1024     # <= physical VMEM on v5e/v6e/v7x


def _laplace_kernel(z_ref, o_ref, *, W, SP):
    """One (TS, L) tile of the row-folded view.

    Each tile row holds RG = L // W consecutive image rows; SP = H // RG tile
    rows make up one (H, W) plane, and every tile starts/ends on a plane
    boundary (TS is a multiple of SP).
    """
    z = z_ref[...]
    TS, L = z.shape
    dt = z.dtype

    def roll(a, shift, axis):
        shift %= a.shape[axis]
        return pltpu.roll(a, shift, axis=axis) if shift else a

    # Lane-only zero-padding masks, built on a (1, L) row (a few vregs of work
    # per grid step) and applied as sublane-broadcast multiplies.
    lane = lax.broadcasted_iota(jnp.int32, (1, L), 1)
    w_in_row = lane if W == L else lane % W
    m_left = (w_in_row > 0).astype(dt)           # w > 0
    m_right = (w_in_row < W - 1).astype(dt)      # w < W - 1

    # +-1 (left/right) neighbours: a lane roll only wraps to the wrong tile row
    # at lane==0 / lane==L-1, and those are already forced to zero by the
    # w==0 / w==W-1 padding masks, so no cross-row carry path is needed.
    acc = roll(z, 1, 1) * m_left + roll(z, -1, 1) * m_right - 4.0 * z

    if SP == 1:
        # Whole (H, W) plane folded into each tile row: the +-W shifts stay in
        # the lane axis and the h==0 / h==H-1 padding is a lane-only mask.
        if W != L:  # H > 1
            m_up = (lane >= W).astype(dt)
            m_down = (lane < L - W).astype(dt)
            acc = acc + roll(z, W, 1) * m_up + roll(z, -W, 1) * m_down
    else:
        # Plane-boundary (top / bottom image row) masks, row-dependent only.
        row = lax.broadcasted_iota(jnp.int32, (TS, 1), 0)
        s = (row & (SP - 1)) if (SP & (SP - 1)) == 0 else (row % SP)
        m_top = (s > 0).astype(dt)          # contains some h > 0
        m_bot = (s < SP - 1).astype(dt)     # contains some h < H - 1

        if W == L:
            # One image row per tile row: +-W is a pure sublane roll.  The
            # wrapped row is only read at a plane top/bottom row (tiles are
            # plane-aligned), where m_top / m_bot zero it.
            acc = acc + roll(z, 1, 0) * m_top + roll(z, -1, 0) * m_bot
        else:
            # General fold: a lane roll gives the same-tile-row part of the
            # shift; a one-sublane roll carries the first/last W lanes across
            # tile rows (review: replaces slice+concat copies).
            m_hi = (lane >= W).astype(dt)
            m_lo = (lane < W).astype(dt)
            m_in = (lane < L - W).astype(dt)
            m_out = (lane >= L - W).astype(dt)
            r_up = roll(z, W, 1)
            r_dn = roll(z, -W, 1)
            acc = acc + r_up * m_hi + (roll(r_up, 1, 0) * m_top) * m_lo
            acc = acc + r_dn * m_in + (roll(r_dn, -1, 0) * m_bot) * m_out

    o_ref[...] = jnp.abs(acc)


def _choose_fold(H, W, itemsize):
    """RG = image rows folded into the lane axis of the 2-D view."""
    plane_bytes = H * W * itemsize
    if (H * W) % 128 == 0 and plane_bytes <= _PLANE_BYTES_CAP:
        return H                     # whole plane per tile row (best path)
    if W % 128 == 0:
        return 1                     # +-W shifts are pure sublane rolls
    for rg in range(2, H + 1):
        if H % rg == 0 and (rg * W) % 128 == 0 and rg * W <= 8192:
            return rg                # smallest 128-aligned partial fold
    if plane_bytes <= _PLANE_BYTES_CAP:
        return H                     # small plane; accept non-128 lane width
    # TODO(synk): very large planes with no 128-aligned fold fall back to
    # RG=1 (masked stores); sub-plane halo tiling not implemented.
    return 1


def _choose_planes_per_block(P, SP, plane_bytes, target_bytes=_TARGET_TILE_BYTES):
    """(planes per grid step, zero planes appended).

    B*SP must be a multiple of 8 (or the block covers the whole array), blocks
    tile the (possibly padded) array exactly, tiles are ~target_bytes, and the
    grid keeps >= 2 steps when possible (pipelining + v7x dual-TC sharding).
    """
    m = 8 // math.gcd(SP, 8)                     # B must be a multiple of m
    budget = max(1, target_bytes // max(plane_bytes, 1))
    divs = [d for d in range(1, P + 1) if P % d == 0 and d % m == 0]
    good = [d for d in divs if d <= budget and P // d >= 2]
    if good:
        return max(good), 0
    if P * plane_bytes <= 4 * target_bytes:
        return P, 0                              # small problem: one block is fine
    small = [d for d in divs if d * plane_bytes <= 4 * target_bytes]
    if small:
        return max(small), 0
    # No suitable divisor: round the block to a multiple of m and pad the plane
    # count with zero planes (sliced off afterwards).
    B = m * max(1, min(budget, P) // m)
    return B, (-P) % B


def laplace(x):
    """x: (N, C, H, W) -> |depthwise 3x3 Laplacian(x)| with zero padding."""
    N, C, H, W = x.shape
    P = N * C
    itemsize = jnp.dtype(x.dtype).itemsize

    RG = _choose_fold(H, W, itemsize)
    SP = H // RG                     # tile rows per (H, W) plane
    L = RG * W                       # lane width of the folded view
    plane_bytes = H * W * itemsize

    B, pad_planes = _choose_planes_per_block(P, SP, plane_bytes)
    TS = B * SP                      # tile rows per grid step

    z = x.reshape(P * SP, L)         # free, contiguous reshape (no copy pass)
    if pad_planes:
        z = jnp.pad(z, ((0, pad_planes * SP), (0, 0)))
    R = z.shape[0]

    kernel = functools.partial(_laplace_kernel, W=W, SP=SP)
    out = pl.pallas_call(
        kernel,
        out_shape=jax.ShapeDtypeStruct((R, L), x.dtype),
        grid_spec=pltpu.PrefetchScalarGridSpec(
            num_scalar_prefetch=0,
            grid=(R // TS,),
            in_specs=[pl.BlockSpec((TS, L), lambda i: (i, 0))],
            out_specs=pl.BlockSpec((TS, L), lambda i: (i, 0)),
        ),
        compiler_params=pltpu.CompilerParams(
            dimension_semantics=("parallel",),
            vmem_limit_bytes=_VMEM_LIMIT_BYTES),
        cost_estimate=pl.CostEstimate(
            flops=6 * x.size,
            transcendentals=0,
            bytes_accessed=2 * x.size * itemsize),
    )(z)

    if pad_planes:
        out = out[:P * SP]
    return out.reshape(N, C, H, W)


def _laplace_ref(x):
    """Pure-JAX reference of the PyTorch module (correctness check)."""
    xp = jnp.pad(x, ((0, 0), (0, 0), (1, 1), (1, 1)))
    lap = (xp[:, :, :-2, 1:-1] + xp[:, :, 2:, 1:-1]
           + xp[:, :, 1:-1, :-2] + xp[:, :, 1:-1, 2:]
           - 4.0 * xp[:, :, 1:-1, 1:-1])
    return jnp.abs(lap)


if __name__ == "__main__":
    key = jax.random.PRNGKey(0)
    N, C, H, W = 2, 4, 16, 16
    x = jax.random.normal(key, (N, C, H, W), dtype=jnp.float32)

    y = laplace(x)
    jax.block_until_ready(y)

    y_ref = _laplace_ref(x)
    assert y.shape == (N, C, H, W)
    assert jnp.allclose(y, y_ref, atol=1e-5, rtol=1e-5), \
        float(jnp.max(jnp.abs(y - y_ref)))

    print("KERNEL_OK")
</pallas_src>

<mosaic_0001>
module attributes {stable_mosaic.version = 11 : i64} {
  func.func @_laplace_kernel(%arg0: i32, %arg1: memref<8x256xf32, #tpu.memory_space<vmem>>, %arg2: memref<8x256xf32, #tpu.memory_space<vmem>>) attributes {dimension_semantics = [#tpu.dimension_semantics<parallel>], iteration_bounds = array<i64: 1>, scalar_prefetch = 0 : i64, scratch_operands = 0 : i64, tpu.core_type = #tpu.core_type<tc>, window_params = [{transform_indices = @transform_0, window_bounds = array<i64: 8, 256>}, {transform_indices = @transform_1, window_bounds = array<i64: 8, 256>}]} {
    %c0 = arith.constant 0 : index
    %c0_0 = arith.constant 0 : index
    %0 = vector.load %arg1[%c0, %c0_0] : memref<8x256xf32, #tpu.memory_space<vmem>>, vector<8x256xf32>
    %1 = tpu.iota {dimensions = array<i32: 1>} : vector<1x256xi32>
    %c16_i32 = arith.constant 16 : i32
    %c0_i32 = arith.constant 0 : i32
    %2 = arith.cmpi eq, %c16_i32, %c0_i32 : i32
    %c1_i32 = arith.constant 1 : i32
    %3 = arith.select %2, %c1_i32, %c16_i32 : i32
    %4 = vector.broadcast %3 : i32 to vector<1x256xi32>
    %5 = arith.remsi %1, %4 : vector<1x256xi32>
    %c0_i32_1 = arith.constant 0 : i32
    %6 = vector.broadcast %c0_i32_1 : i32 to vector<1x256xi32>
    %7 = arith.cmpi ne, %5, %6 : vector<1x256xi32>
    %c0_i32_2 = arith.constant 0 : i32
    %8 = vector.broadcast %c0_i32_2 : i32 to vector<1x256xi32>
    %9 = arith.cmpi slt, %5, %8 : vector<1x256xi32>
    %c0_i32_3 = arith.constant 0 : i32
    %10 = arith.cmpi slt, %3, %c0_i32_3 : i32
    %11 = vector.broadcast %10 : i1 to vector<1x256xi1>
    %12 = vector.broadcast %11 : vector<1x256xi1> to vector<1x256xi1>
    %13 = arith.xori %9, %12 : vector<1x256xi1>
    %14 = arith.andi %13, %7 : vector<1x256xi1>
    %15 = vector.broadcast %3 : i32 to vector<1x256xi32>
    %16 = arith.addi %5, %15 : vector<1x256xi32>
    %17 = arith.select %14, %16, %5 : vector<1x256xi1>, vector<1x256xi32>
    %c0_i32_4 = arith.constant 0 : i32
    %18 = vector.broadcast %c0_i32_4 : i32 to vector<1x256xi32>
    %19 = arith.cmpi sgt, %17, %18 : vector<1x256xi32>
    %20 = arith.extui %19 : vector<1x256xi1> to vector<1x256xi32>
    %21 = arith.sitofp %20 : vector<1x256xi32> to vector<1x256xf32>
    %c15_i32 = arith.constant 15 : i32
    %22 = vector.broadcast %c15_i32 : i32 to vector<1x256xi32>
    %23 = arith.cmpi slt, %17, %22 : vector<1x256xi32>
    %24 = arith.extui %23 : vector<1x256xi1> to vector<1x256xi32>
    %25 = arith.sitofp %24 : vector<1x256xi32> to vector<1x256xf32>
    %c1_i32_5 = arith.constant 1 : i32
    %26 = tpu.dynamic_rotate %0 by %c1_i32_5 dim 1 : vector<8x256xf32>, i32 -> vector<8x256xf32>
    %27 = vector.broadcast %21 : vector<1x256xf32> to vector<8x256xf32>
    %28 = arith.mulf %26, %27 : vector<8x256xf32>
    %c255_i32 = arith.constant 255 : i32
    %29 = tpu.dynamic_rotate %0 by %c255_i32 dim 1 : vector<8x256xf32>, i32 -> vector<8x256xf32>
    %30 = vector.broadcast %25 : vector<1x256xf32> to vector<8x256xf32>
    %31 = arith.mulf %29, %30 : vector<8x256xf32>
    %32 = arith.addf %28, %31 : vector<8x256xf32>
    %cst = arith.constant 4.000000e+00 : f32
    %33 = vector.broadcast %cst : f32 to vector<8x256xf32>
    %34 = arith.mulf %33, %0 : vector<8x256xf32>
    %35 = arith.subf %32, %34 : vector<8x256xf32>
    %c16_i32_6 = arith.constant 16 : i32
    %36 = vector.broadcast %c16_i32_6 : i32 to vector<1x256xi32>
    %37 = arith.cmpi sge, %1, %36 : vector<1x256xi32>
    %38 = arith.extui %37 : vector<1x256xi1> to vector<1x256xi32>
    %39 = arith.sitofp %38 : vector<1x256xi32> to vector<1x256xf32>
    %c240_i32 = arith.constant 240 : i32
    %40 = vector.broadcast %c240_i32 : i32 to vector<1x256xi32>
    %41 = arith.cmpi slt, %1, %40 : vector<1x256xi32>
    %42 = arith.extui %41 : vector<1x256xi1> to vector<1x256xi32>
    %43 = arith.sitofp %42 : vector<1x256xi32> to vector<1x256xf32>
    %c16_i32_7 = arith.constant 16 : i32
    %44 = tpu.dynamic_rotate %0 by %c16_i32_7 dim 1 : vector<8x256xf32>, i32 -> vector<8x256xf32>
    %45 = vector.broadcast %39 : vector<1x256xf32> to vector<8x256xf32>
    %46 = arith.mulf %44, %45 : vector<8x256xf32>
    %47 = arith.addf %35, %46 : vector<8x256xf32>
    %c240_i32_8 = arith.constant 240 : i32
    %48 = tpu.dynamic_rotate %0 by %c240_i32_8 dim 1 : vector<8x256xf32>, i32 -> vector<8x256xf32>
    %49 = vector.broadcast %43 : vector<1x256xf32> to vector<8x256xf32>
    %50 = arith.mulf %48, %49 : vector<8x256xf32>
    %51 = arith.addf %47, %50 : vector<8x256xf32>
    %52 = math.absf %51 : vector<8x256xf32>
    %c0_9 = arith.constant 0 : index
    %c0_10 = arith.constant 0 : index
    %53 = vector.load %arg2[%c0_9, %c0_10] : memref<8x256xf32, #tpu.memory_space<vmem>>, vector<8x256xf32>
    tpu.vector_store %arg2[%c0_9, %c0_10], %52 {strides = array<i32>} : memref<8x256xf32, #tpu.memory_space<vmem>>, vector<8x256xf32>,
    return
  }
  func.func @transform_0(%arg0: i32) -> (i32, i32) {
    %c0_i32 = arith.constant 0 : i32
    %c0_i32_0 = arith.constant 0 : i32
    return %arg0, %c0_i32 : i32, i32
  }
  func.func @transform_1(%arg0: i32) -> (i32, i32) {
    %c0_i32 = arith.constant 0 : i32
    %c0_i32_0 = arith.constant 0 : i32
    return %arg0, %c0_i32 : i32, i32
  }
}

</mosaic_0001>

<llo_original>
// kernel: tpu_custom_call.1
$region0: #{tpu_custom_call.1}
  #allocation0 [shape = 'u32[]', space=smem, size = 0x4, offset = 0x4, fixed_abs, tag = 'smem constant byte address 0x4 - core index']
  #allocation1 [shape = 'u32[144,128]{1,0:T(1,128)}', space=vmem, size = 0x12000, scoped, tag = 'internal scratch']
  %s0 = inlined_call_operand.hbm [shape: f32[8,256], index: 0, kind: input, shape index: {}]
  %s1 = inlined_call_operand.hbm [shape: f32[8,256], index: 1, kind: output, shape index: {}]
  %s2 = sld [smem:[#allocation0]]
  $region18: #{tpu_custom_call.1} parent=0
    _
  %s4 = ssub.s32 1, %s2
  %s5 = scalar_select 0, %s4, %s2
  $region1: #{tpu_custom_call.1} parent=0
    #allocation2 [shape = 'u8[8192]{0}', space=vmem, size = 0x2000, scoped, tag = 'input window, operand 0, single buffered']
    #allocation3 [shape = 's32[1]{0}', space=sflag, size = 0x4, scoped, tag = 'scoped memory for tpu_custom_call.1']
    #allocation4 [shape = 's32[1]{0}', space=sflag, size = 0x4, scoped, tag = 'scoped memory for tpu_custom_call.1']
    #allocation5 [shape = 'u8[8192]{0}', space=vmem, size = 0x2000, scoped, tag = 'output window, operand 0, single buffered']
    %6 = vsyncpa [#allocation3], 0
    %7 = vsyncpa [#allocation4], 0
    // Predicated region
    $region2: #{tpu_custom_call.1} parent=1 // pred_check
      _
    $region3: #{tpu_custom_call.1} parent=1 // pred_check_branch
      %9 = sbr.rel (0) target = $region5
    $region4: #{tpu_custom_call.1} parent=1 // pred_region
      %s11 = ssub.s32 256, 256
      %12 = vsyncadd [#allocation3], %s11
      %s14 = sshll.u32 [#allocation2], 4
      %s15 = int_to_ptr.vmem [resolvable:$true] %s14
      %17 = dma.hbm_to_vmem [thread:$0]  %s0, 256, %s15, [#allocation3]
    $region5: #{tpu_custom_call.1} parent=1 // pred_fallthru
      _
    // Predicated region
    $region6: #{tpu_custom_call.1} parent=1 // pred_check
      _
    $region7: #{tpu_custom_call.1} parent=1 // pred_check_branch
      %19 = sbr.rel (0) target = $region9
    $region8: #{tpu_custom_call.1} parent=1 // pred_region
      %20 = dma.done [#allocation3], 256
    $region9: #{tpu_custom_call.1} parent=1 // pred_fallthru
      _
    %v21 = vld [vmem:[#allocation2] sm:$0xff]
    %v22 = vld [vmem:[#allocation2 + $0x8] sm:$0xff]
    %v23 = vlaneseq
    %v24 = vand.u32 %v23, 127
    %v25 = vadd.s32 %v24, 128
    %vm26 = vcmp.lt.s32.totalorder %v24, 0
    %v27 = vsub.s32 0, %v24
    %v28 = vsel %vm26, %v27, %v24
    %v29 = vshrl.u32 %v28, 4
    %v30 = vand.u32 %v28, 15
    %v31 = vsub.s32 0, %v30
    %v32 = vsel %vm26, %v31, %v30
    %vm33 = vcmp.lt.s32.totalorder %v25, 0
    %v34 = vsub.s32 0, %v25
    %v35 = vsel %vm33, %v34, %v25
    %v36 = vshrl.u32 %v35, 4
    %v37 = vand.u32 %v35, 15
    %v38 = vsub.s32 0, %v37
    %v39 = vsel %vm33, %v38, %v37
    %vm40 = vcmp.ne.s32.totalorder %v32, 0
    %vm41 = vcmp.ne.s32.totalorder %v39, 0
    %vm42 = vcmp.lt.s32.totalorder %v32, 0
    %vm43 = vcmp.lt.s32.totalorder %v39, 0
    %vm44 = vmand %vm42, %vm40
    %vm45 = vmand %vm43, %vm41
    %v46 = vadd.s32 %v32, 16
    %v47 = vadd.s32 %v39, 16
    %v48 = vsel %vm44, %v46, %v32
    %v49 = vsel %vm45, %v47, %v39
    %vm50 = vcmp.gt.s32.totalorder %v48, 0
    %vm51 = vcmp.gt.s32.totalorder %v49, 0
    %v52 = vsel %vm50, 1, 0
    %v53 = vsel %vm51, 1, 0
    %v54 = vcvt.s32.f32 %v52
    %v55 = vcvt.s32.f32 %v53
    %vm56 = vcmp.lt.s32.totalorder %v48, 15
    %vm57 = vcmp.lt.s32.totalorder %v49, 15
    %v58 = vsel %vm56, 1, 0
    %v59 = vsel %vm57, 1, 0
    %v60 = vcvt.s32.f32 %v58
    %v61 = vcvt.s32.f32 %v59
    %62 = vrot.lane.b32.xlu0 %v21, 1
    %v63 = vpop.permute.xlu0 %62
    %64 = vrot.lane.b32.xlu0 %v22, 1
    %v65 = vpop.permute.xlu0 %64
    %vm66 = vcmp.lt.s32.totalorder %v24, 1
    %v67 = vsel %vm66, %v63, %v65
    %v68 = vsel %vm66, %v65, %v63
    %v69 = vmul.f32 %v68, %v54
    %v70 = vmul.f32 %v67, %v55
    %71 = vrot.lane.b32.xlu0 %v21, 127
    %v72 = vpop.permute.xlu0 %71
    %73 = vrot.lane.b32.xlu0 %v22, 127
    %v74 = vpop.permute.xlu0 %73
    %vm75 = vcmp.lt.s32.totalorder %v24, 127
    %v76 = vsel %vm75, %v72, %v74
    %v77 = vsel %vm75, %v74, %v72
    %v78 = vmul.f32 %v76, %v60
    %v79 = vmul.f32 %v77, %v61
    %v80 = vadd.f32 %v69, %v78
    %v81 = vadd.f32 %v70, %v79
    %v82 = vmul.f32 %v21, 4.0
    %v83 = vmul.f32 %v22, 4.0
    %v84 = vsub.f32 %v80, %v82
    %v85 = vsub.f32 %v81, %v83
    %vm86 = vcmp.ge.s32.totalorder %v24, 16
    %vm87 = vcmp.ge.s32.totalorder %v25, 16
    %v88 = vsel %vm86, 1, 0
    %v89 = vsel %vm87, 1, 0
    %v90 = vcvt.s32.f32 %v88
    %v91 = vcvt.s32.f32 %v89
    %vm92 = vcmp.lt.s32.totalorder %v24, 240
    %vm93 = vcmp.lt.s32.totalorder %v25, 240
    %v94 = vsel %vm92, 1, 0
    %v95 = vsel %vm93, 1, 0
    %v96 = vcvt.s32.f32 %v94
    %v97 = vcvt.s32.f32 %v95
    %98 = vrot.lane.b32.xlu0 %v21, 16
    %v99 = vpop.permute.xlu0 %98
    %100 = vrot.lane.b32.xlu0 %v22, 16
    %v101 = vpop.permute.xlu0 %100
    %vm102 = vcmp.lt.s32.totalorder %v24, 16
    %v103 = vsel %vm102, %v99, %v101
    %v104 = vsel %vm102, %v101, %v99
    %v105 = vmul.f32 %v104, %v90
    %v106 = vmul.f32 %v103, %v91
    %v107 = vadd.f32 %v84, %v105
    %v108 = vadd.f32 %v85, %v106
    %109 = vrot.lane.b32.xlu0 %v21, 112
    %v110 = vpop.permute.xlu0 %109
    %111 = vrot.lane.b32.xlu0 %v22, 112
    %v112 = vpop.permute.xlu0 %111
    %vm113 = vcmp.lt.s32.totalorder %v24, 112
    %v114 = vsel %vm113, %v110, %v112
    %v115 = vsel %vm113, %v112, %v110
    %v116 = vmul.f32 %v114, %v96
    %v117 = vmul.f32 %v115, %v97
    %v118 = vadd.f32 %v107, %v116
    %v119 = vadd.f32 %v108, %v117
    %v120 = vand.u32 2147483647, %v118
    %v121 = vand.u32 2147483647, %v119
    %122 = vst [vmem:[#allocation5] sm:$0xff] %v120
    %123 = vst [vmem:[#allocation5 + $0x8] sm:$0xff] %v121
    // Predicated region
    $region10: #{tpu_custom_call.1} parent=1 // pred_check
      _
    $region11: #{tpu_custom_call.1} parent=1 // pred_check_branch
      %125 = sbr.rel (0) target = $region13
    $region12: #{tpu_custom_call.1} parent=1 // pred_region
      %s127 = ssub.s32 256, 256
      %128 = vsyncadd [#allocation4], %s127
      %s130 = sshll.u32 [#allocation5], 4
      %s131 = int_to_ptr.vmem [resolvable:$true] %s130
      %133 = dma.vmem_to_hbm [thread:$0]  %s131, 256, %s1, [#allocation4]
    $region13: #{tpu_custom_call.1} parent=1 // pred_fallthru
      _
    // Predicated region
    $region14: #{tpu_custom_call.1} parent=1 // pred_check
      _
    $region15: #{tpu_custom_call.1} parent=1 // pred_check_branch
      %135 = sbr.rel (0) target = $region17
    $region16: #{tpu_custom_call.1} parent=1 // pred_region
      %136 = dma.done [#allocation4], 256
    $region17: #{tpu_custom_call.1} parent=1 // pred_fallthru
      _
    %137 = vsyncpa [#allocation3], 1
    %138 = vsyncpa [#allocation4], 1

</llo_original>
